<compile_context>
chip_gen: v7x
topology: tpu7x:2x2x1
jax: 0.10.0
libtpu: 0.0.40
codegen_flags: <defaults>
</compile_context>

<pallas_src>
import numpy as np
import jax
import jax.numpy as jnp
from jax import lax
from jax.experimental import pallas as pl
from jax.experimental.pallas import tpu as pltpu


def _cdiv(a, b):
    return (a + b - 1) // b


# ----------------------------------------------------------------------------------
# Distant cross entropy (mask=None):  loss = -mean_rows( sum(p*log_softmax(x)) / sum(p) )
# ----------------------------------------------------------------------------------
def _make_distant_ce_kernel(C, tc, cs, grid_c):
    """Build the kernel with the class geometry closed over as Python ints."""
    # Static sub-chunk table for one class tile (chunk starts are multiples of cs,
    # hence 128-lane aligned; the final chunk may be narrower).
    chunks = []
    off = 0
    while off < tc:
        w = min(cs, tc - off)
        chunks.append((off, w))
        off += w
    base_last = (grid_c - 1) * tc  # column offset of the last class-grid tile

    def kernel(x_ref, p_ref, loss_ref, m_sc, l_sc, spx_sc, den_sc):
        k = pl.program_id(1)  # class-tile index (reduction axis, innermost)

        @pl.when(k == 0)
        def _init():
            m_sc[...] = jnp.full_like(m_sc, -1e30)
            l_sc[...] = jnp.zeros_like(l_sc)
            spx_sc[...] = jnp.zeros_like(spx_sc)
            den_sc[...] = jnp.zeros_like(den_sc)

        # Pull the carried stats once per grid step (single scratch RMW per step).
        m = m_sc[...]
        l = l_sc[...]
        spx = spx_sc[...]
        den = den_sc[...]

        col_base = k * tc  # traced scalar: absolute column of this tile's first lane

        for (coff, w) in chunks:
            xc = x_ref[:, coff:coff + w].astype(jnp.float32)   # [tb, w] f32
            pos = p_ref[:, coff:coff + w] != 0                 # [tb, w] bool (no f32 convert)

            # Column masking is only emitted for chunks that can overhang the real C
            # (i.e. only when the last class-grid tile is ragged) — zero cost otherwise.
            if base_last + coff + w > C:
                col = lax.broadcasted_iota(jnp.int32, xc.shape, 1)
                ok = col < (C - col_base - coff)
                xc = jnp.where(ok, xc, -1e30)
                pos = jnp.logical_and(pos, ok)

            # Online logsumexp update (chunk-local temporaries only).
            m_new = jnp.maximum(m, jnp.max(xc, axis=-1, keepdims=True))
            alpha = jnp.exp(m - m_new)
            l = alpha * l + jnp.sum(jnp.exp(xc - m_new), axis=-1, keepdims=True)
            m = m_new

            # Weighted sums from the boolean mask (num = sum(p*x) - lse*sum(p) later).
            spx = spx + jnp.sum(jnp.where(pos, xc, 0.0), axis=-1, keepdims=True)
            den = den + jnp.sum(jnp.where(pos, 1.0, 0.0), axis=-1, keepdims=True)

        m_sc[...] = m
        l_sc[...] = l
        spx_sc[...] = spx
        den_sc[...] = den

        @pl.when(k == grid_c - 1)
        def _finalize():
            lse = m + jnp.log(l)                         # [tb,1]
            has = den > 0.0                              # guard rows with no positives
            inv = pl.reciprocal(jnp.where(has, den, 1.0), approx=False)
            loss_ref[...] = jnp.where(has, (lse * den - spx) * inv, 0.0)

    return kernel


def distant_ce(logits, positions, *, tb=None, tc_max=2048, cs=512,
               core_parallel_batch=False):
    """Distant_CE()(logits, positions) with mask=None.

    logits:    [B, C] (any float dtype, bf16 recommended)
    positions: [B, C] 0/1 indicator (int8 / bool / float)
    Returns scalar f32 loss. Rows with no positive position contribute 0 (no NaN).
    """
    assert logits.shape == positions.shape and logits.ndim == 2
    B, C = logits.shape
    assert cs % 128 == 0

    # ---- tiles: never larger than the real array dims, no HBM-side padding --------
    if tb is None:
        tb = 512                               # v7x-safe cap; also fine for v5e/v6e
    tb = min(tb, B)
    if B >= 8:
        tb = max(8, (tb // 8) * 8)             # sublane multiple (else tb == B < 8)

    if C <= tc_max:
        tc = C                                 # single exact class tile, no masking
    else:
        tc = max(128, (tc_max // cs) * cs)     # lane- and chunk-aligned

    grid_b = _cdiv(B, tb)
    grid_c = _cdiv(C, tc)

    kernel = _make_distant_ce_kernel(C=C, tc=tc, cs=cs, grid_c=grid_c)

    # Batch axis: "parallel"; flip to CORE_PARALLEL on v7x if one TC is observed idle.
    batch_sem = pltpu.CORE_PARALLEL if core_parallel_batch else pltpu.PARALLEL

    per_row = pl.pallas_call(
        kernel,
        out_shape=jax.ShapeDtypeStruct((B, 1), jnp.float32),
        grid_spec=pltpu.PrefetchScalarGridSpec(
            num_scalar_prefetch=0,
            grid=(grid_b, grid_c),
            in_specs=[
                pl.BlockSpec((tb, tc), lambda i, k: (i, k)),
                pl.BlockSpec((tb, tc), lambda i, k: (i, k)),
            ],
            out_specs=pl.BlockSpec((tb, 1), lambda i, k: (i, 0)),
            scratch_shapes=[pltpu.VMEM((tb, 1), jnp.float32)] * 4,
        ),
        compiler_params=pltpu.CompilerParams(
            dimension_semantics=(batch_sem, pltpu.ARBITRARY),
            # Double-buffered inputs + chunk temporaries + stats stay < ~12 MiB at the
            # default tiles; set the scoped limit explicitly (valid on v5e/v6e/v7x).
            vmem_limit_bytes=32 * 1024 * 1024,
        ),
    )(logits, positions)

    return jnp.mean(per_row)


def _distant_ce_ref(logits, positions):
    lp = jax.nn.log_softmax(logits.astype(jnp.float32), axis=-1)
    p = positions.astype(jnp.float32)
    return -jnp.mean(jnp.sum(p * lp, axis=-1) / jnp.sum(p, axis=-1))


# ----------------------------------------------------------------------------------
# ImageModel.get_resnet_prompt pooling: AvgPool2d(kernel=ft//2, stride=ft//2) -> 2x2
# ----------------------------------------------------------------------------------
def _prompt_pool_kernel(x_ref, p_ref, o_ref):
    xf = x_ref[...].astype(jnp.float32)                 # [tr, S]
    for c in range(o_ref.shape[-1]):                    # 4 output positions (2x2)
        w = p_ref[c:c + 1, :]                           # [1, S] pooling weights
        o_ref[:, c:c + 1] = jnp.sum(xf * w, axis=-1, keepdims=True)


def resnet_prompt_pool(x, *, row_tile=256):
    """prompt_kv = nn.AvgPool2d(kernel_size=ft//2, stride=ft//2)(x) for x [B,C,ft,ft]."""
    B, C, H, W = x.shape
    assert H == W and H >= 2
    kk = H // 2
    oh = (H - kk) // kk + 1
    ow = (W - kk) // kk + 1                              # == 2 for the resnet stages
    S = H * W

    # Small static pooling-weight matrix (ignores the trailing row/col for odd ft,
    # exactly like AvgPool2d with ceil_mode=False).
    P = np.zeros((oh * ow, S), np.float32)
    for h in range(H):
        for w in range(W):
            oi, oj = h // kk, w // kk
            if oi < oh and oj < ow:
                P[oi * ow + oj, h * W + w] = 1.0 / (kk * kk)
    P = jnp.asarray(P)

    xf = x.reshape(B * C, S)
    R = B * C
    tr = min(row_tile, R)
    if R >= 8:
        tr = max(8, (tr // 8) * 8)

    out = pl.pallas_call(
        _prompt_pool_kernel,
        out_shape=jax.ShapeDtypeStruct((R, oh * ow), jnp.float32),
        grid_spec=pltpu.PrefetchScalarGridSpec(
            num_scalar_prefetch=0,
            grid=(_cdiv(R, tr),),
            in_specs=[
                pl.BlockSpec((tr, S), lambda i: (i, 0)),
                pl.BlockSpec((oh * ow, S), lambda i: (0, 0)),
            ],
            out_specs=pl.BlockSpec((tr, oh * ow), lambda i: (i, 0)),
        ),
        compiler_params=pltpu.CompilerParams(
            dimension_semantics=(pltpu.PARALLEL,),
        ),
    )(xf, P)
    return out.reshape(B, C, oh, ow).astype(x.dtype)


def _avgpool_ref(x):
    kk = x.shape[2] // 2
    s = lax.reduce_window(x.astype(jnp.float32), 0.0, lax.add,
                          window_dimensions=(1, 1, kk, kk),
                          window_strides=(1, 1, kk, kk),
                          padding="VALID")
    return (s / float(kk * kk)).astype(x.dtype)


# ----------------------------------------------------------------------------------
if __name__ == "__main__":
    key = jax.random.PRNGKey(0)

    # ---- ImageModel prompt extraction on synthetic stage feature maps -------------
    stage_shapes = [(2, 4, 16, 16), (2, 8, 8, 8)]   # two synthetic "layer" outputs
    for shp in stage_shapes:
        key, kx = jax.random.split(key)
        feat = jax.random.normal(kx, shp, dtype=jnp.float32)
        pk = resnet_prompt_pool(feat)
        jax.block_until_ready(pk)
        ref = _avgpool_ref(feat)
        assert pk.shape == ref.shape, (pk.shape, ref.shape)
        assert jnp.allclose(pk, ref, atol=1e-4, rtol=1e-4), (
            shp, float(jnp.max(jnp.abs(pk - ref))))

    # ---- distant CE kernel ---------------------------------------------------------
    cases = [
        dict(B=8,  C=16,  kw={}),                                  # tiny, single tile
        dict(B=48, C=300, kw={}),                                  # exact non-128 C tile
        dict(B=40, C=333, kw=dict(tb=16, tc_max=128, cs=128)),     # ragged class + batch grid
        dict(B=24, C=900, kw=dict(tb=8,  tc_max=512, cs=256)),     # multi-chunk, masked chunk
    ]
    for cfg in cases:
        key, k1, k2 = jax.random.split(key, 3)
        B, C = cfg["B"], cfg["C"]
        logits = jax.random.normal(k1, (B, C), dtype=jnp.float32).astype(jnp.bfloat16)
        positions = jax.random.bernoulli(k2, 0.3, (B, C))
        positions = positions.at[:, 0].set(True)        # >=1 positive per row
        positions = positions.astype(jnp.int8)

        loss = distant_ce(logits, positions, **cfg["kw"])
        jax.block_until_ready(loss)
        ref = _distant_ce_ref(logits, positions)
        assert jnp.allclose(loss, ref, atol=1e-4, rtol=1e-4), (
            B, C, float(loss), float(ref))

    print("KERNEL_OK")
</pallas_src>

<mosaic_0001>
module attributes {stable_mosaic.version = 11 : i64} {
  func.func @_prompt_pool_kernel(%arg0: i32, %arg1: memref<8x256xf32, #tpu.memory_space<vmem>>, %arg2: memref<4x256xf32, #tpu.memory_space<vmem>>, %arg3: memref<8x4xf32, #tpu.memory_space<vmem>>) attributes {dimension_semantics = [#tpu.dimension_semantics<parallel>], iteration_bounds = array<i64: 1>, scalar_prefetch = 0 : i64, scratch_operands = 0 : i64, tpu.core_type = #tpu.core_type<tc>, window_params = [{transform_indices = @transform_0, window_bounds = array<i64: 8, 256>}, {pipeline_mode = #tpu.pipeline_mode<synchronous>, transform_indices = @transform_1, window_bounds = array<i64: 4, 256>}, {transform_indices = @transform_2, window_bounds = array<i64: 8, 4>}]} {
    %c0 = arith.constant 0 : index
    %c0_0 = arith.constant 0 : index
    %0 = vector.load %arg1[%c0, %c0_0] : memref<8x256xf32, #tpu.memory_space<vmem>>, vector<8x256xf32>
    %c0_1 = arith.constant 0 : index
    %c0_2 = arith.constant 0 : index
    %1 = vector.load %arg2[%c0_1, %c0_2] : memref<4x256xf32, #tpu.memory_space<vmem>>, vector<1x256xf32>
    %2 = vector.broadcast %1 : vector<1x256xf32> to vector<8x256xf32>
    %3 = arith.mulf %0, %2 : vector<8x256xf32>
    %cst = arith.constant dense<0.000000e+00> : vector<8xf32>
    %4 = vector.multi_reduction <add>, %3, %cst [1] : vector<8x256xf32> to vector<8xf32>
    %5 = vector.shape_cast %4 : vector<8xf32> to vector<8x1xf32>
    %c0_3 = arith.constant 0 : index
    %c0_4 = arith.constant 0 : index
    %6 = vector.load %arg3[%c0_3, %c0_4] : memref<8x4xf32, #tpu.memory_space<vmem>>, vector<8x1xf32>
    tpu.vector_store %arg3[%c0_3, %c0_4], %5 {strides = array<i32>} : memref<8x4xf32, #tpu.memory_space<vmem>>, vector<8x1xf32>,
    %c1 = arith.constant 1 : index
    %c0_5 = arith.constant 0 : index
    %7 = vector.load %arg2[%c1, %c0_5] : memref<4x256xf32, #tpu.memory_space<vmem>>, vector<1x256xf32>
    %8 = vector.broadcast %7 : vector<1x256xf32> to vector<8x256xf32>
    %9 = arith.mulf %0, %8 : vector<8x256xf32>
    %cst_6 = arith.constant dense<0.000000e+00> : vector<8xf32>
    %10 = vector.multi_reduction <add>, %9, %cst_6 [1] : vector<8x256xf32> to vector<8xf32>
    %11 = vector.shape_cast %10 : vector<8xf32> to vector<8x1xf32>
    %c0_7 = arith.constant 0 : index
    %c1_8 = arith.constant 1 : index
    %12 = vector.load %arg3[%c0_7, %c1_8] : memref<8x4xf32, #tpu.memory_space<vmem>>, vector<8x1xf32>
    tpu.vector_store %arg3[%c0_7, %c1_8], %11 {strides = array<i32>} : memref<8x4xf32, #tpu.memory_space<vmem>>, vector<8x1xf32>,
    %c2 = arith.constant 2 : index
    %c0_9 = arith.constant 0 : index
    %13 = vector.load %arg2[%c2, %c0_9] : memref<4x256xf32, #tpu.memory_space<vmem>>, vector<1x256xf32>
    %14 = vector.broadcast %13 : vector<1x256xf32> to vector<8x256xf32>
    %15 = arith.mulf %0, %14 : vector<8x256xf32>
    %cst_10 = arith.constant dense<0.000000e+00> : vector<8xf32>
    %16 = vector.multi_reduction <add>, %15, %cst_10 [1] : vector<8x256xf32> to vector<8xf32>
    %17 = vector.shape_cast %16 : vector<8xf32> to vector<8x1xf32>
    %c0_11 = arith.constant 0 : index
    %c2_12 = arith.constant 2 : index
    %18 = vector.load %arg3[%c0_11, %c2_12] : memref<8x4xf32, #tpu.memory_space<vmem>>, vector<8x1xf32>
    tpu.vector_store %arg3[%c0_11, %c2_12], %17 {strides = array<i32>} : memref<8x4xf32, #tpu.memory_space<vmem>>, vector<8x1xf32>,
    %c3 = arith.constant 3 : index
    %c0_13 = arith.constant 0 : index
    %19 = vector.load %arg2[%c3, %c0_13] : memref<4x256xf32, #tpu.memory_space<vmem>>, vector<1x256xf32>
    %20 = vector.broadcast %19 : vector<1x256xf32> to vector<8x256xf32>
    %21 = arith.mulf %0, %20 : vector<8x256xf32>
    %cst_14 = arith.constant dense<0.000000e+00> : vector<8xf32>
    %22 = vector.multi_reduction <add>, %21, %cst_14 [1] : vector<8x256xf32> to vector<8xf32>
    %23 = vector.shape_cast %22 : vector<8xf32> to vector<8x1xf32>
    %c0_15 = arith.constant 0 : index
    %c3_16 = arith.constant 3 : index
    %24 = vector.load %arg3[%c0_15, %c3_16] : memref<8x4xf32, #tpu.memory_space<vmem>>, vector<8x1xf32>
    tpu.vector_store %arg3[%c0_15, %c3_16], %23 {strides = array<i32>} : memref<8x4xf32, #tpu.memory_space<vmem>>, vector<8x1xf32>,
    return
  }
  func.func @transform_0(%arg0: i32) -> (i32, i32) {
    %c0_i32 = arith.constant 0 : i32
    %c0_i32_0 = arith.constant 0 : i32
    return %arg0, %c0_i32 : i32, i32
  }
  func.func @transform_1(%arg0: i32) -> (i32, i32) {
    %c0_i32 = arith.constant 0 : i32
    %c0_i32_0 = arith.constant 0 : i32
    %c0_i32_1 = arith.constant 0 : i32
    return %c0_i32, %c0_i32_0 : i32, i32
  }
  func.func @transform_2(%arg0: i32) -> (i32, i32) {
    %c0_i32 = arith.constant 0 : i32
    %c0_i32_0 = arith.constant 0 : i32
    return %arg0, %c0_i32 : i32, i32
  }
}

</mosaic_0001>

<llo_original>
// kernel: tpu_custom_call.1
$region0: #{tpu_custom_call.1}
  #allocation0 [shape = 'u32[]', space=smem, size = 0x4, offset = 0x4, fixed_abs, tag = 'smem constant byte address 0x4 - core index']
  #allocation1 [shape = 'u32[144,128]{1,0:T(1,128)}', space=vmem, size = 0x12000, scoped, tag = 'internal scratch']
  %s0 = inlined_call_operand.hbm [shape: f32[8,256], index: 0, kind: input, shape index: {}]
  %s1 = inlined_call_operand.hbm [shape: f32[4,256], index: 1, kind: input, shape index: {}]
  %s2 = inlined_call_operand.vmem [shape: f32[8,4], index: 2, kind: output, shape index: {}]
  %s3 = sld [smem:[#allocation0]]
  $region26: #{tpu_custom_call.1} parent=0
    _
  %s5 = ssub.s32 1, %s3
  %s6 = scalar_select 0, %s5, %s3
  $region1: #{tpu_custom_call.1} parent=0
    #allocation2 [shape = 'u8[8192]{0}', space=vmem, size = 0x2000, scoped, tag = 'input window, operand 0, single buffered']
    #allocation3 [shape = 's32[1]{0}', space=sflag, size = 0x4, scoped, tag = 'scoped memory for tpu_custom_call.1']
    #allocation4 [shape = 'u8[4096]{0}', space=vmem, size = 0x1000, scoped, tag = 'input window, operand 1, single buffered']
    #allocation5 [shape = 's32[1]{0}', space=sflag, size = 0x4, scoped, tag = 'scoped memory for tpu_custom_call.1']
    %7 = vsyncpa [#allocation3], 0
    %8 = vsyncpa [#allocation5], 0
    // Predicated region
    $region2: #{tpu_custom_call.1} parent=1 // pred_check
      _
    $region3: #{tpu_custom_call.1} parent=1 // pred_check_branch
      %10 = sbr.rel (0) target = $region5
    $region4: #{tpu_custom_call.1} parent=1 // pred_region
      %s12 = ssub.s32 256, 256
      %13 = vsyncadd [#allocation3], %s12
      %s15 = sshll.u32 [#allocation2], 4
      %s16 = int_to_ptr.vmem [resolvable:$true] %s15
      %18 = dma.hbm_to_vmem [thread:$0]  %s0, 256, %s16, [#allocation3]
    $region5: #{tpu_custom_call.1} parent=1 // pred_fallthru
      _
    // Predicated region
    $region6: #{tpu_custom_call.1} parent=1 // pred_check
      _
    $region7: #{tpu_custom_call.1} parent=1 // pred_check_branch
      %20 = sbr.rel (0) target = $region9
    $region8: #{tpu_custom_call.1} parent=1 // pred_region
      %s22 = ssub.s32 128, 128
      %23 = vsyncadd [#allocation5], %s22
      %s25 = sshll.u32 [#allocation4], 4
      %s26 = int_to_ptr.vmem [resolvable:$true] %s25
      %28 = dma.hbm_to_vmem [thread:$0]  %s1, 128, %s26, [#allocation5]
    $region9: #{tpu_custom_call.1} parent=1 // pred_fallthru
      _
    // Predicated region
    $region10: #{tpu_custom_call.1} parent=1 // pred_check
      _
    $region11: #{tpu_custom_call.1} parent=1 // pred_check_branch
      %30 = sbr.rel (0) target = $region13
    $region12: #{tpu_custom_call.1} parent=1 // pred_region
      %31 = dma.done [#allocation3], 256
    $region13: #{tpu_custom_call.1} parent=1 // pred_fallthru
      _
    // Predicated region
    $region14: #{tpu_custom_call.1} parent=1 // pred_check
      _
    $region15: #{tpu_custom_call.1} parent=1 // pred_check_branch
      %33 = sbr.rel (0) target = $region17
    $region16: #{tpu_custom_call.1} parent=1 // pred_region
      %34 = dma.done [#allocation5], 128
    $region17: #{tpu_custom_call.1} parent=1 // pred_fallthru
      _
    %v35 = vld [vmem:[#allocation2] sm:$0xff]
    %v36 = vld [vmem:[#allocation2 + $0x8] sm:$0xff]
    %v37 = vld [vmem:[#allocation4] ss:$4 sm:$0x3]
    %v39 = vlaneseq
    %v40 = vshrl.u32 %v39, 7
    %v41 = vsub.s32 0, %v40
    %v42 = vrot.slane %v37, %v41
    %v43 = vlaneseq
    %v44 = vshrl.u32 %v43, 7
    %v45 = vsub.s32 1, %v44
    %v46 = vrot.slane %v37, %v45
    %v49 = vmul.f32 %v35, %v42
    %v50 = vmul.f32 %v36, %v46
    %v51 = vadd.f32 %v49, %v50
    %52 = vadd.xlane.f32.xlu0 %v51
    %v53 = vpop.xlane.xlu0 %52
    %vm54 = vcmask 7168
    %55 = vst.msk [vmem:[%s2] sm:$0xff] %vm54, %v53
    %s56 = scalar_lea.vmem [#allocation4], 1
    %v57 = vld [vmem:[%s56] ss:$4 sm:$0x3]
    %v59 = vlaneseq
    %v60 = vshrl.u32 %v59, 7
    %v61 = vsub.s32 0, %v60
    %v62 = vrot.slane %v57, %v61
    %v63 = vlaneseq
    %v64 = vshrl.u32 %v63, 7
    %v65 = vsub.s32 1, %v64
    %v66 = vrot.slane %v57, %v65
    %v69 = vmul.f32 %v35, %v62
    %v70 = vmul.f32 %v36, %v66
    %v71 = vadd.f32 %v69, %v70
    %72 = vadd.xlane.f32.xlu0 %v71
    %v73 = vpop.xlane.xlu0 %72
    %vm74 = vcmask 15368
    %75 = vst.msk [vmem:[%s2] sm:$0xff] %vm74, %v73
    %s76 = scalar_lea.vmem [#allocation4], 2
    %v77 = vld [vmem:[%s76] ss:$4 sm:$0x3]
    %v79 = vlaneseq
    %v80 = vshrl.u32 %v79, 7
    %v81 = vsub.s32 0, %v80
    %v82 = vrot.slane %v77, %v81
    %v83 = vlaneseq
    %v84 = vshrl.u32 %v83, 7
    %v85 = vsub.s32 1, %v84
    %v86 = vrot.slane %v77, %v85
    %v89 = vmul.f32 %v35, %v82
    %v90 = vmul.f32 %v36, %v86
    %v91 = vadd.f32 %v89, %v90
    %92 = vadd.xlane.f32.xlu0 %v91
    %v93 = vpop.xlane.xlu0 %92
    %vm94 = vcmask 23568
    %95 = vst.msk [vmem:[%s2] sm:$0xff] %vm94, %v93
    %s96 = scalar_lea.vmem [#allocation4], 3
    %v97 = vld [vmem:[%s96] ss:$4 sm:$0x3]
    %v99 = vlaneseq
    %v100 = vshrl.u32 %v99, 7
    %v101 = vsub.s32 0, %v100
    %v102 = vrot.slane %v97, %v101
    %v103 = vlaneseq
    %v104 = vshrl.u32 %v103, 7
    %v105 = vsub.s32 1, %v104
    %v106 = vrot.slane %v97, %v105
    %v109 = vmul.f32 %v35, %v102
    %v110 = vmul.f32 %v36, %v106
    %v111 = vadd.f32 %v109, %v110
    %112 = vadd.xlane.f32.xlu0 %v111
    %v113 = vpop.xlane.xlu0 %112
    %vm114 = vcmask 31768
    %115 = vst.msk [vmem:[%s2] sm:$0xff] %vm114, %v113
    // Predicated region
    $region18: #{tpu_custom_call.1} parent=1 // pred_check
      _
    $region19: #{tpu_custom_call.1} parent=1 // pred_check_branch
      %117 = sbr.rel (0) target = $region21
    $region20: #{tpu_custom_call.1} parent=1 // pred_region
      _
    $region21: #{tpu_custom_call.1} parent=1 // pred_fallthru
      _
    // Predicated region
    $region22: #{tpu_custom_call.1} parent=1 // pred_check
      _
    $region23: #{tpu_custom_call.1} parent=1 // pred_check_branch
      %119 = sbr.rel (0) target = $region25
    $region24: #{tpu_custom_call.1} parent=1 // pred_region
      _
    $region25: #{tpu_custom_call.1} parent=1 // pred_fallthru
      _
    %120 = vsyncpa [#allocation3], 1
    %121 = vsyncpa [#allocation5], 1

</llo_original>
